<compile_context>
chip_gen: v7x
topology: tpu7x:2x2x1
jax: 0.10.0
libtpu: 0.0.40
codegen_flags: <defaults>
</compile_context>

<pallas_src>
import jax
import jax.numpy as jnp
from jax.experimental import pallas as pl
from jax.experimental.pallas import tpu as pltpu


def _make_nonlocal_kernel(C, IC, Z, offs, block_n, chunk_n):
    Zn = Z // 2
    n_chunks = block_n // chunk_n

    def kernel(prm_ref, x_ref, o_ref):
        # x_ref / o_ref block: (C, Z, block_n) -- locations live in the lane
        # axis.  The big DMA block is walked in lane chunks so the vreg
        # working set stays small (review: decouple DMA block / compute tile).
        def chunk_body(j, carry):
            n0 = pl.multiple_of(j * chunk_n, chunk_n)

            def load_x(c):
                return x_ref[c, :, pl.ds(n0, chunk_n)].astype(jnp.float32)

            def project(w_off, b_off):
                """1x1x1 conv (C -> IC): unrolled scalar*vector multiply-adds.

                x is (re)loaded here instead of being held live across the
                whole chunk body (review: lazy reads -> lower vreg pressure;
                the re-reads ride under-used vld slots).
                """
                xs = [load_x(c) for c in range(C)]
                outs = []
                for i in range(IC):
                    acc = prm_ref[w_off + i * C] * xs[0]
                    for c in range(1, C):
                        acc = acc + prm_ref[w_off + i * C + c] * xs[c]
                    outs.append(acc + prm_ref[b_off + i])
                return outs

            theta = project(offs['wt'], offs['bt'])      # IC x (Z, chunk)
            phi = project(offs['wp'], offs['bp'])
            g = project(offs['wg'], offs['bg'])

            def pool_row(t, w):
                # MaxPool3d((1,1,2)) along Z: max of adjacent rows -> (1, chunk).
                # Each pooled row is computed exactly once at its single use
                # site below, so there is no redundant pooling to hoist; a
                # packed (Zn, chunk) pool was evaluated but rejected (sublane
                # concat/relayout risk, no register win at chunk_n=256).
                return jnp.maximum(t[2 * w:2 * w + 1, :], t[2 * w + 1:2 * w + 2, :])

            # Attention logits f[:, w, :] = sum_i theta_i * phi_pool_i[w].
            f_w = []
            for w in range(Zn):
                acc = theta[0] * pool_row(phi[0], w)
                for i in range(1, IC):
                    acc = acc + theta[i] * pool_row(phi[i], w)
                f_w.append(acc)

            # Softmax over the pooled axis w (small unrolled reduction).
            m = f_w[0]
            for w in range(1, Zn):
                m = jnp.maximum(m, f_w[w])
            e_w = [jnp.exp(fw - m) for fw in f_w]
            s = e_w[0]
            for w in range(1, Zn):
                s = s + e_w[w]
            inv = pl.reciprocal(s, approx=True)      # EUP slot
            inv = inv * (2.0 - s * inv)              # one Newton step -> near-exact
            p_w = [ew * inv for ew in e_w]

            # y_i = sum_w softmax_w * g_pool_i[w]  -> IC x (Z, chunk)
            y = []
            for i in range(IC):
                acc = p_w[0] * pool_row(g[i], 0)
                for w in range(1, Zn):
                    acc = acc + p_w[w] * pool_row(g[i], w)
                y.append(acc)

            # W: 1x1x1 conv (IC -> C) with eval-mode BatchNorm pre-folded into
            # the weights/bias on the host, then the residual add.
            # TODO(synk): training-mode BatchNorm3d (batch statistics /
            # running-stat updates) is not computed in-kernel.
            for c in range(C):
                acc = y[0] * prm_ref[offs['ww'] + c * IC]
                for i in range(1, IC):
                    acc = acc + y[i] * prm_ref[offs['ww'] + c * IC + i]
                acc = acc + prm_ref[offs['bw'] + c]
                o_ref[c, :, pl.ds(n0, chunk_n)] = (acc + load_x(c)).astype(o_ref.dtype)
            return carry

        jax.lax.fori_loop(0, n_chunks, chunk_body, 0)

    return kernel


def _pack_params(params):
    """Pack all tiny weights/biases (BN folded into the W conv) into one f32 vec."""
    C = params['w_w'].shape[0]
    IC = params['w_theta'].shape[0]
    bn_scale = params['bn_gamma'] / jnp.sqrt(params['bn_var'] + 1e-5)
    bn_shift = params['bn_beta'] - params['bn_mean'] * bn_scale
    w_w_fold = params['w_w'] * bn_scale[:, None]          # (C, IC)
    b_w_fold = params['b_w'] * bn_scale + bn_shift        # (C,)
    flat = [
        ('wt', params['w_theta'].reshape(-1)), ('wp', params['w_phi'].reshape(-1)),
        ('wg', params['w_g'].reshape(-1)),     ('ww', w_w_fold.reshape(-1)),
        ('bt', params['b_theta'].reshape(-1)), ('bp', params['b_phi'].reshape(-1)),
        ('bg', params['b_g'].reshape(-1)),     ('bw', b_w_fold.reshape(-1)),
    ]
    offs, off = {}, 0
    for name, arr in flat:
        offs[name] = off
        off += int(arr.shape[0])
    prm = jnp.concatenate([a.astype(jnp.float32) for _, a in flat])
    return prm, offs, C, IC


def nonlocal_block_czn(x_czn, params, *, block_n=2048, chunk_n=256):
    """Non-local block directly on (C, Z, N) activations (N = B*W*H in lanes).

    Use this form when stacking several non-local blocks so the two layout
    transposes are hoisted out of the layer loop (review item).
    """
    C, Z, N = x_czn.shape
    assert Z % 2 == 0, "MaxPool3d((1,1,2)) path requires an even Z"
    prm, offs, Cw, IC = _pack_params(params)
    assert Cw == C

    # Big lane-dense blocks amortise per-grid-step overhead; cap at ~N/2 so
    # the grid keeps >= 2 steps when possible (both v7x TensorCores get work).
    block_n = max(128, (block_n // 128) * 128)
    half_n = ((N + 1) // 2 + 127) // 128 * 128
    block_n = min(block_n, max(128, half_n))
    # Compute-tile chunk: lane-dense divisor of block_n (caps vreg pressure).
    chunk_n = max(128, min((chunk_n // 128) * 128, block_n))
    while block_n % chunk_n != 0:
        chunk_n -= 128
    grid_n = pl.cdiv(N, block_n)   # ragged last block handled by Pallas

    kernel = _make_nonlocal_kernel(C, IC, Z, offs, block_n, chunk_n)

    # VMEM budget: double-buffered input + output tiles plus spill headroom.
    tile_bytes = C * Z * block_n * x_czn.dtype.itemsize
    vmem_limit = int(min(4 * tile_bytes + (16 << 20), 64 << 20))

    return pl.pallas_call(
        kernel,
        out_shape=jax.ShapeDtypeStruct((C, Z, N), x_czn.dtype),
        grid=(grid_n,),
        in_specs=[
            pl.BlockSpec(memory_space=pltpu.MemorySpace.SMEM),      # packed params
            pl.BlockSpec((C, Z, block_n), lambda i: (0, 0, i)),     # activations
        ],
        out_specs=pl.BlockSpec((C, Z, block_n), lambda i: (0, 0, i)),
        compiler_params=pltpu.CompilerParams(
            dimension_semantics=("parallel",),
            vmem_limit_bytes=vmem_limit),
    )(prm, x_czn)


def nonlocal_block(x, params, *, block_n=2048, chunk_n=256):
    """x: (B, C, W, H, Z).  Returns (B, C, W, H, Z); matches the PyTorch forward."""
    B, C, W, H, Z = x.shape
    N = B * W * H
    # TODO(synk): these two layout transposes are a full HBM round-trip each;
    # in a real model keep activations in (C, Z, N) across consecutive blocks
    # (call nonlocal_block_czn) or fuse the transposes into producer/consumer.
    x_czn = jnp.transpose(x, (1, 4, 0, 2, 3)).reshape(C, Z, N)
    out = nonlocal_block_czn(x_czn, params, block_n=block_n, chunk_n=chunk_n)
    out = out.reshape(C, Z, B, W, H)
    return jnp.transpose(out, (2, 0, 3, 4, 1))


def nonlocal_reference(x, params):
    """Pure-JAX reference matching the PyTorch forward (eval-mode BN)."""
    B, C, W, H, Z = x.shape
    IC = params['w_theta'].shape[0]
    Zn = Z // 2
    xc = jnp.transpose(x, (0, 2, 3, 4, 1)).astype(jnp.float32)  # (B,W,H,Z,C)

    def conv1(x5, w, b):
        return jnp.einsum('bwhzc,ic->bwhzi', x5, w) + b

    theta = conv1(xc, params['w_theta'], params['b_theta'])
    phi = conv1(xc, params['w_phi'], params['b_phi'])
    g = conv1(xc, params['w_g'], params['b_g'])
    phi_p = jnp.max(phi.reshape(B, W, H, Zn, 2, IC), axis=4)
    g_p = jnp.max(g.reshape(B, W, H, Zn, 2, IC), axis=4)

    theta_r = theta.reshape(-1, Z, IC)
    phi_r = phi_p.reshape(-1, Zn, IC)
    g_r = g_p.reshape(-1, Zn, IC)
    f = jnp.einsum('nzi,nwi->nzw', theta_r, phi_r)
    fd = jax.nn.softmax(f, axis=-1)
    y = jnp.einsum('nzw,nwi->nzi', fd, g_r)

    wy = jnp.einsum('nzi,ci->nzc', y, params['w_w']) + params['b_w']
    scale = params['bn_gamma'] / jnp.sqrt(params['bn_var'] + 1e-5)
    shift = params['bn_beta'] - params['bn_mean'] * scale
    wy = wy * scale + shift
    out = (wy + xc.reshape(-1, Z, C)).reshape(B, W, H, Z, C)
    return jnp.transpose(out, (0, 4, 1, 2, 3)).astype(x.dtype)


if __name__ == "__main__":
    B, C, W, H, Z = 2, 4, 16, 16, 8
    IC = max(C // 2, 1)

    key = jax.random.PRNGKey(0)
    ks = jax.random.split(key, 9)
    params = {
        'w_theta': jax.random.normal(ks[0], (IC, C), jnp.float32) * 0.2,
        'b_theta': jax.random.normal(ks[1], (IC,), jnp.float32) * 0.1,
        'w_phi':   jax.random.normal(ks[2], (IC, C), jnp.float32) * 0.2,
        'b_phi':   jax.random.normal(ks[3], (IC,), jnp.float32) * 0.1,
        'w_g':     jax.random.normal(ks[4], (IC, C), jnp.float32) * 0.2,
        'b_g':     jax.random.normal(ks[5], (IC,), jnp.float32) * 0.1,
        'w_w':     jax.random.normal(ks[6], (C, IC), jnp.float32) * 0.2,
        'b_w':     jax.random.normal(ks[7], (C,), jnp.float32) * 0.1,
        # NOTE: the PyTorch __init__ zeroes BN gamma/beta (block starts as an
        # identity); use nonzero values so the attention path is exercised.
        'bn_gamma': jnp.full((C,), 0.5, jnp.float32),
        'bn_beta':  jnp.full((C,), 0.1, jnp.float32),
        'bn_mean':  jnp.zeros((C,), jnp.float32),
        'bn_var':   jnp.ones((C,), jnp.float32),
    }

    x = jax.random.normal(ks[8], (B, C, W, H, Z), jnp.float32)

    fn = jax.jit(nonlocal_block)
    out = jax.block_until_ready(fn(x, params))
    ref = nonlocal_reference(x, params)

    assert out.shape == x.shape
    if not jnp.allclose(out, ref, atol=1e-4, rtol=1e-4):
        raise AssertionError("Pallas kernel output mismatches JAX reference")
    print("KERNEL_OK")
</pallas_src>

<mosaic_0001>
module attributes {stable_mosaic.version = 11 : i64} {
  func.func @kernel(%arg0: i32, %arg1: memref<42xf32, #tpu.memory_space<smem>>, %arg2: memref<4x8x256xf32, #tpu.memory_space<vmem>>, %arg3: memref<4x8x256xf32, #tpu.memory_space<vmem>>) attributes {dimension_semantics = [#tpu.dimension_semantics<parallel>], iteration_bounds = array<i64: 2>, scalar_prefetch = 0 : i64, scratch_operands = 0 : i64, tpu.core_type = #tpu.core_type<tc>, window_params = [{transform_indices = @transform_0, window_bounds = array<i64: 42>}, {transform_indices = @transform_1, window_bounds = array<i64: 4, 8, 256>}, {transform_indices = @transform_2, window_bounds = array<i64: 4, 8, 256>}]} {
    %c0_i32 = arith.constant 0 : i32
    %c256_i32 = arith.constant 256 : i32
    %0 = arith.muli %c0_i32, %c256_i32 : i32
    %1 = tpu.assume_multiple %0, 256 : i32
    %c0 = arith.constant 0 : index
    %c0_0 = arith.constant 0 : index
    %2 = arith.index_cast %1 : i32 to index
    %3 = vector.load %arg2[%c0, %c0_0, %2] : memref<4x8x256xf32, #tpu.memory_space<vmem>>, vector<1x8x256xf32>
    %4 = vector.shape_cast %3 : vector<1x8x256xf32> to vector<8x256xf32>
    %c1 = arith.constant 1 : index
    %c0_1 = arith.constant 0 : index
    %5 = arith.index_cast %1 : i32 to index
    %6 = vector.load %arg2[%c1, %c0_1, %5] : memref<4x8x256xf32, #tpu.memory_space<vmem>>, vector<1x8x256xf32>
    %7 = vector.shape_cast %6 : vector<1x8x256xf32> to vector<8x256xf32>
    %c2 = arith.constant 2 : index
    %c0_2 = arith.constant 0 : index
    %8 = arith.index_cast %1 : i32 to index
    %9 = vector.load %arg2[%c2, %c0_2, %8] : memref<4x8x256xf32, #tpu.memory_space<vmem>>, vector<1x8x256xf32>
    %10 = vector.shape_cast %9 : vector<1x8x256xf32> to vector<8x256xf32>
    %c3 = arith.constant 3 : index
    %c0_3 = arith.constant 0 : index
    %11 = arith.index_cast %1 : i32 to index
    %12 = vector.load %arg2[%c3, %c0_3, %11] : memref<4x8x256xf32, #tpu.memory_space<vmem>>, vector<1x8x256xf32>
    %13 = vector.shape_cast %12 : vector<1x8x256xf32> to vector<8x256xf32>
    %c0_4 = arith.constant 0 : index
    %14 = memref.load %arg1[%c0_4] : memref<42xf32, #tpu.memory_space<smem>>
    %15 = vector.broadcast %14 : f32 to vector<8x256xf32>
    %16 = arith.mulf %15, %4 : vector<8x256xf32>
    %c1_5 = arith.constant 1 : index
    %17 = memref.load %arg1[%c1_5] : memref<42xf32, #tpu.memory_space<smem>>
    %18 = vector.broadcast %17 : f32 to vector<8x256xf32>
    %19 = arith.mulf %18, %7 : vector<8x256xf32>
    %20 = arith.addf %16, %19 : vector<8x256xf32>
    %c2_6 = arith.constant 2 : index
    %21 = memref.load %arg1[%c2_6] : memref<42xf32, #tpu.memory_space<smem>>
    %22 = vector.broadcast %21 : f32 to vector<8x256xf32>
    %23 = arith.mulf %22, %10 : vector<8x256xf32>
    %24 = arith.addf %20, %23 : vector<8x256xf32>
    %c3_7 = arith.constant 3 : index
    %25 = memref.load %arg1[%c3_7] : memref<42xf32, #tpu.memory_space<smem>>
    %26 = vector.broadcast %25 : f32 to vector<8x256xf32>
    %27 = arith.mulf %26, %13 : vector<8x256xf32>
    %28 = arith.addf %24, %27 : vector<8x256xf32>
    %c32 = arith.constant 32 : index
    %29 = memref.load %arg1[%c32] : memref<42xf32, #tpu.memory_space<smem>>
    %30 = vector.broadcast %29 : f32 to vector<8x256xf32>
    %31 = arith.addf %28, %30 : vector<8x256xf32>
    %c4 = arith.constant 4 : index
    %32 = memref.load %arg1[%c4] : memref<42xf32, #tpu.memory_space<smem>>
    %33 = vector.broadcast %32 : f32 to vector<8x256xf32>
    %34 = arith.mulf %33, %4 : vector<8x256xf32>
    %c5 = arith.constant 5 : index
    %35 = memref.load %arg1[%c5] : memref<42xf32, #tpu.memory_space<smem>>
    %36 = vector.broadcast %35 : f32 to vector<8x256xf32>
    %37 = arith.mulf %36, %7 : vector<8x256xf32>
    %38 = arith.addf %34, %37 : vector<8x256xf32>
    %c6 = arith.constant 6 : index
    %39 = memref.load %arg1[%c6] : memref<42xf32, #tpu.memory_space<smem>>
    %40 = vector.broadcast %39 : f32 to vector<8x256xf32>
    %41 = arith.mulf %40, %10 : vector<8x256xf32>
    %42 = arith.addf %38, %41 : vector<8x256xf32>
    %c7 = arith.constant 7 : index
    %43 = memref.load %arg1[%c7] : memref<42xf32, #tpu.memory_space<smem>>
    %44 = vector.broadcast %43 : f32 to vector<8x256xf32>
    %45 = arith.mulf %44, %13 : vector<8x256xf32>
    %46 = arith.addf %42, %45 : vector<8x256xf32>
    %c33 = arith.constant 33 : index
    %47 = memref.load %arg1[%c33] : memref<42xf32, #tpu.memory_space<smem>>
    %48 = vector.broadcast %47 : f32 to vector<8x256xf32>
    %49 = arith.addf %46, %48 : vector<8x256xf32>
    %c0_8 = arith.constant 0 : index
    %c0_9 = arith.constant 0 : index
    %50 = arith.index_cast %1 : i32 to index
    %51 = vector.load %arg2[%c0_8, %c0_9, %50] : memref<4x8x256xf32, #tpu.memory_space<vmem>>, vector<1x8x256xf32>
    %52 = vector.shape_cast %51 : vector<1x8x256xf32> to vector<8x256xf32>
    %c1_10 = arith.constant 1 : index
    %c0_11 = arith.constant 0 : index
    %53 = arith.index_cast %1 : i32 to index
    %54 = vector.load %arg2[%c1_10, %c0_11, %53] : memref<4x8x256xf32, #tpu.memory_space<vmem>>, vector<1x8x256xf32>
    %55 = vector.shape_cast %54 : vector<1x8x256xf32> to vector<8x256xf32>
    %c2_12 = arith.constant 2 : index
    %c0_13 = arith.constant 0 : index
    %56 = arith.index_cast %1 : i32 to index
    %57 = vector.load %arg2[%c2_12, %c0_13, %56] : memref<4x8x256xf32, #tpu.memory_space<vmem>>, vector<1x8x256xf32>
    %58 = vector.shape_cast %57 : vector<1x8x256xf32> to vector<8x256xf32>
    %c3_14 = arith.constant 3 : index
    %c0_15 = arith.constant 0 : index
    %59 = arith.index_cast %1 : i32 to index
    %60 = vector.load %arg2[%c3_14, %c0_15, %59] : memref<4x8x256xf32, #tpu.memory_space<vmem>>, vector<1x8x256xf32>
    %61 = vector.shape_cast %60 : vector<1x8x256xf32> to vector<8x256xf32>
    %c8 = arith.constant 8 : index
    %62 = memref.load %arg1[%c8] : memref<42xf32, #tpu.memory_space<smem>>
    %63 = vector.broadcast %62 : f32 to vector<8x256xf32>
    %64 = arith.mulf %63, %52 : vector<8x256xf32>
    %c9 = arith.constant 9 : index
    %65 = memref.load %arg1[%c9] : memref<42xf32, #tpu.memory_space<smem>>
    %66 = vector.broadcast %65 : f32 to vector<8x256xf32>
    %67 = arith.mulf %66, %55 : vector<8x256xf32>
    %68 = arith.addf %64, %67 : vector<8x256xf32>
    %c10 = arith.constant 10 : index
    %69 = memref.load %arg1[%c10] : memref<42xf32, #tpu.memory_space<smem>>
    %70 = vector.broadcast %69 : f32 to vector<8x256xf32>
    %71 = arith.mulf %70, %58 : vector<8x256xf32>
    %72 = arith.addf %68, %71 : vector<8x256xf32>
    %c11 = arith.constant 11 : index
    %73 = memref.load %arg1[%c11] : memref<42xf32, #tpu.memory_space<smem>>
    %74 = vector.broadcast %73 : f32 to vector<8x256xf32>
    %75 = arith.mulf %74, %61 : vector<8x256xf32>
    %76 = arith.addf %72, %75 : vector<8x256xf32>
    %c34 = arith.constant 34 : index
    %77 = memref.load %arg1[%c34] : memref<42xf32, #tpu.memory_space<smem>>
    %78 = vector.broadcast %77 : f32 to vector<8x256xf32>
    %79 = arith.addf %76, %78 : vector<8x256xf32>
    %c12 = arith.constant 12 : index
    %80 = memref.load %arg1[%c12] : memref<42xf32, #tpu.memory_space<smem>>
    %81 = vector.broadcast %80 : f32 to vector<8x256xf32>
    %82 = arith.mulf %81, %52 : vector<8x256xf32>
    %c13 = arith.constant 13 : index
    %83 = memref.load %arg1[%c13] : memref<42xf32, #tpu.memory_space<smem>>
    %84 = vector.broadcast %83 : f32 to vector<8x256xf32>
    %85 = arith.mulf %84, %55 : vector<8x256xf32>
    %86 = arith.addf %82, %85 : vector<8x256xf32>
    %c14 = arith.constant 14 : index
    %87 = memref.load %arg1[%c14] : memref<42xf32, #tpu.memory_space<smem>>
    %88 = vector.broadcast %87 : f32 to vector<8x256xf32>
    %89 = arith.mulf %88, %58 : vector<8x256xf32>
    %90 = arith.addf %86, %89 : vector<8x256xf32>
    %c15 = arith.constant 15 : index
    %91 = memref.load %arg1[%c15] : memref<42xf32, #tpu.memory_space<smem>>
    %92 = vector.broadcast %91 : f32 to vector<8x256xf32>
    %93 = arith.mulf %92, %61 : vector<8x256xf32>
    %94 = arith.addf %90, %93 : vector<8x256xf32>
    %c35 = arith.constant 35 : index
    %95 = memref.load %arg1[%c35] : memref<42xf32, #tpu.memory_space<smem>>
    %96 = vector.broadcast %95 : f32 to vector<8x256xf32>
    %97 = arith.addf %94, %96 : vector<8x256xf32>
    %c0_16 = arith.constant 0 : index
    %c0_17 = arith.constant 0 : index
    %98 = arith.index_cast %1 : i32 to index
    %99 = vector.load %arg2[%c0_16, %c0_17, %98] : memref<4x8x256xf32, #tpu.memory_space<vmem>>, vector<1x8x256xf32>
    %100 = vector.shape_cast %99 : vector<1x8x256xf32> to vector<8x256xf32>
    %c1_18 = arith.constant 1 : index
    %c0_19 = arith.constant 0 : index
    %101 = arith.index_cast %1 : i32 to index
    %102 = vector.load %arg2[%c1_18, %c0_19, %101] : memref<4x8x256xf32, #tpu.memory_space<vmem>>, vector<1x8x256xf32>
    %103 = vector.shape_cast %102 : vector<1x8x256xf32> to vector<8x256xf32>
    %c2_20 = arith.constant 2 : index
    %c0_21 = arith.constant 0 : index
    %104 = arith.index_cast %1 : i32 to index
    %105 = vector.load %arg2[%c2_20, %c0_21, %104] : memref<4x8x256xf32, #tpu.memory_space<vmem>>, vector<1x8x256xf32>
    %106 = vector.shape_cast %105 : vector<1x8x256xf32> to vector<8x256xf32>
    %c3_22 = arith.constant 3 : index
    %c0_23 = arith.constant 0 : index
    %107 = arith.index_cast %1 : i32 to index
    %108 = vector.load %arg2[%c3_22, %c0_23, %107] : memref<4x8x256xf32, #tpu.memory_space<vmem>>, vector<1x8x256xf32>
    %109 = vector.shape_cast %108 : vector<1x8x256xf32> to vector<8x256xf32>
    %c16 = arith.constant 16 : index
    %110 = memref.load %arg1[%c16] : memref<42xf32, #tpu.memory_space<smem>>
    %111 = vector.broadcast %110 : f32 to vector<8x256xf32>
    %112 = arith.mulf %111, %100 : vector<8x256xf32>
    %c17 = arith.constant 17 : index
    %113 = memref.load %arg1[%c17] : memref<42xf32, #tpu.memory_space<smem>>
    %114 = vector.broadcast %113 : f32 to vector<8x256xf32>
    %115 = arith.mulf %114, %103 : vector<8x256xf32>
    %116 = arith.addf %112, %115 : vector<8x256xf32>
    %c18 = arith.constant 18 : index
    %117 = memref.load %arg1[%c18] : memref<42xf32, #tpu.memory_space<smem>>
    %118 = vector.broadcast %117 : f32 to vector<8x256xf32>
    %119 = arith.mulf %118, %106 : vector<8x256xf32>
    %120 = arith.addf %116, %119 : vector<8x256xf32>
    %c19 = arith.constant 19 : index
    %121 = memref.load %arg1[%c19] : memref<42xf32, #tpu.memory_space<smem>>
    %122 = vector.broadcast %121 : f32 to vector<8x256xf32>
    %123 = arith.mulf %122, %109 : vector<8x256xf32>
    %124 = arith.addf %120, %123 : vector<8x256xf32>
    %c36 = arith.constant 36 : index
    %125 = memref.load %arg1[%c36] : memref<42xf32, #tpu.memory_space<smem>>
    %126 = vector.broadcast %125 : f32 to vector<8x256xf32>
    %127 = arith.addf %124, %126 : vector<8x256xf32>
    %c20 = arith.constant 20 : index
    %128 = memref.load %arg1[%c20] : memref<42xf32, #tpu.memory_space<smem>>
    %129 = vector.broadcast %128 : f32 to vector<8x256xf32>
    %130 = arith.mulf %129, %100 : vector<8x256xf32>
    %c21 = arith.constant 21 : index
    %131 = memref.load %arg1[%c21] : memref<42xf32, #tpu.memory_space<smem>>
    %132 = vector.broadcast %131 : f32 to vector<8x256xf32>
    %133 = arith.mulf %132, %103 : vector<8x256xf32>
    %134 = arith.addf %130, %133 : vector<8x256xf32>
    %c22 = arith.constant 22 : index
    %135 = memref.load %arg1[%c22] : memref<42xf32, #tpu.memory_space<smem>>
    %136 = vector.broadcast %135 : f32 to vector<8x256xf32>
    %137 = arith.mulf %136, %106 : vector<8x256xf32>
    %138 = arith.addf %134, %137 : vector<8x256xf32>
    %c23 = arith.constant 23 : index
    %139 = memref.load %arg1[%c23] : memref<42xf32, #tpu.memory_space<smem>>
    %140 = vector.broadcast %139 : f32 to vector<8x256xf32>
    %141 = arith.mulf %140, %109 : vector<8x256xf32>
    %142 = arith.addf %138, %141 : vector<8x256xf32>
    %c37 = arith.constant 37 : index
    %143 = memref.load %arg1[%c37] : memref<42xf32, #tpu.memory_space<smem>>
    %144 = vector.broadcast %143 : f32 to vector<8x256xf32>
    %145 = arith.addf %142, %144 : vector<8x256xf32>
    %146 = vector.extract_strided_slice %79 {offsets = [0, 0], sizes = [1, 256], strides = [1, 1]} : vector<8x256xf32> to vector<1x256xf32>
    %147 = vector.extract_strided_slice %79 {offsets = [1, 0], sizes = [1, 256], strides = [1, 1]} : vector<8x256xf32> to vector<1x256xf32>
    %148 = arith.maximumf %146, %147 : vector<1x256xf32>
    %149 = vector.broadcast %148 : vector<1x256xf32> to vector<8x256xf32>
    %150 = arith.mulf %31, %149 : vector<8x256xf32>
    %151 = vector.extract_strided_slice %97 {offsets = [0, 0], sizes = [1, 256], strides = [1, 1]} : vector<8x256xf32> to vector<1x256xf32>
    %152 = vector.extract_strided_slice %97 {offsets = [1, 0], sizes = [1, 256], strides = [1, 1]} : vector<8x256xf32> to vector<1x256xf32>
    %153 = arith.maximumf %151, %152 : vector<1x256xf32>
    %154 = vector.broadcast %153 : vector<1x256xf32> to vector<8x256xf32>
    %155 = arith.mulf %49, %154 : vector<8x256xf32>
    %156 = arith.addf %150, %155 : vector<8x256xf32>
    %157 = vector.extract_strided_slice %79 {offsets = [2, 0], sizes = [1, 256], strides = [1, 1]} : vector<8x256xf32> to vector<1x256xf32>
    %158 = vector.extract_strided_slice %79 {offsets = [3, 0], sizes = [1, 256], strides = [1, 1]} : vector<8x256xf32> to vector<1x256xf32>
    %159 = arith.maximumf %157, %158 : vector<1x256xf32>
    %160 = vector.broadcast %159 : vector<1x256xf32> to vector<8x256xf32>
    %161 = arith.mulf %31, %160 : vector<8x256xf32>
    %162 = vector.extract_strided_slice %97 {offsets = [2, 0], sizes = [1, 256], strides = [1, 1]} : vector<8x256xf32> to vector<1x256xf32>
    %163 = vector.extract_strided_slice %97 {offsets = [3, 0], sizes = [1, 256], strides = [1, 1]} : vector<8x256xf32> to vector<1x256xf32>
    %164 = arith.maximumf %162, %163 : vector<1x256xf32>
    %165 = vector.broadcast %164 : vector<1x256xf32> to vector<8x256xf32>
    %166 = arith.mulf %49, %165 : vector<8x256xf32>
    %167 = arith.addf %161, %166 : vector<8x256xf32>
    %168 = vector.extract_strided_slice %79 {offsets = [4, 0], sizes = [1, 256], strides = [1, 1]} : vector<8x256xf32> to vector<1x256xf32>
    %169 = vector.extract_strided_slice %79 {offsets = [5, 0], sizes = [1, 256], strides = [1, 1]} : vector<8x256xf32> to vector<1x256xf32>
    %170 = arith.maximumf %168, %169 : vector<1x256xf32>
    %171 = vector.broadcast %170 : vector<1x256xf32> to vector<8x256xf32>
    %172 = arith.mulf %31, %171 : vector<8x256xf32>
    %173 = vector.extract_strided_slice %97 {offsets = [4, 0], sizes = [1, 256], strides = [1, 1]} : vector<8x256xf32> to vector<1x256xf32>
    %174 = vector.extract_strided_slice %97 {offsets = [5, 0], sizes = [1, 256], strides = [1, 1]} : vector<8x256xf32> to vector<1x256xf32>
    %175 = arith.maximumf %173, %174 : vector<1x256xf32>
    %176 = vector.broadcast %175 : vector<1x256xf32> to vector<8x256xf32>
    %177 = arith.mulf %49, %176 : vector<8x256xf32>
    %178 = arith.addf %172, %177 : vector<8x256xf32>
    %179 = vector.extract_strided_slice %79 {offsets = [6, 0], sizes = [1, 256], strides = [1, 1]} : vector<8x256xf32> to vector<1x256xf32>
    %180 = vector.extract_strided_slice %79 {offsets = [7, 0], sizes = [1, 256], strides = [1, 1]} : vector<8x256xf32> to vector<1x256xf32>
    %181 = arith.maximumf %179, %180 : vector<1x256xf32>
    %182 = vector.broadcast %181 : vector<1x256xf32> to vector<8x256xf32>
    %183 = arith.mulf %31, %182 : vector<8x256xf32>
    %184 = vector.extract_strided_slice %97 {offsets = [6, 0], sizes = [1, 256], strides = [1, 1]} : vector<8x256xf32> to vector<1x256xf32>
    %185 = vector.extract_strided_slice %97 {offsets = [7, 0], sizes = [1, 256], strides = [1, 1]} : vector<8x256xf32> to vector<1x256xf32>
    %186 = arith.maximumf %184, %185 : vector<1x256xf32>
    %187 = vector.broadcast %186 : vector<1x256xf32> to vector<8x256xf32>
    %188 = arith.mulf %49, %187 : vector<8x256xf32>
    %189 = arith.addf %183, %188 : vector<8x256xf32>
    %190 = arith.maximumf %156, %167 : vector<8x256xf32>
    %191 = arith.maximumf %190, %178 : vector<8x256xf32>
    %192 = arith.maximumf %191, %189 : vector<8x256xf32>
    %193 = arith.subf %156, %192 : vector<8x256xf32>
    %194 = math.exp %193 : vector<8x256xf32>
    %195 = arith.subf %167, %192 : vector<8x256xf32>
    %196 = math.exp %195 : vector<8x256xf32>
    %197 = arith.subf %178, %192 : vector<8x256xf32>
    %198 = math.exp %197 : vector<8x256xf32>
    %199 = arith.subf %189, %192 : vector<8x256xf32>
    %200 = math.exp %199 : vector<8x256xf32>
    %201 = arith.addf %194, %196 : vector<8x256xf32>
    %202 = arith.addf %201, %198 : vector<8x256xf32>
    %203 = arith.addf %202, %200 : vector<8x256xf32>
    %204 = tpu.reciprocal %203 {approx = true} : vector<8x256xf32> -> vector<8x256xf32>
    %205 = arith.mulf %203, %204 : vector<8x256xf32>
    %cst = arith.constant 2.000000e+00 : f32
    %206 = vector.broadcast %cst : f32 to vector<8x256xf32>
    %207 = arith.subf %206, %205 : vector<8x256xf32>
    %208 = arith.mulf %204, %207 : vector<8x256xf32>
    %209 = arith.mulf %194, %208 : vector<8x256xf32>
    %210 = arith.mulf %196, %208 : vector<8x256xf32>
    %211 = arith.mulf %198, %208 : vector<8x256xf32>
    %212 = arith.mulf %200, %208 : vector<8x256xf32>
    %213 = vector.extract_strided_slice %127 {offsets = [0, 0], sizes = [1, 256], strides = [1, 1]} : vector<8x256xf32> to vector<1x256xf32>
    %214 = vector.extract_strided_slice %127 {offsets = [1, 0], sizes = [1, 256], strides = [1, 1]} : vector<8x256xf32> to vector<1x256xf32>
    %215 = arith.maximumf %213, %214 : vector<1x256xf32>
    %216 = vector.broadcast %215 : vector<1x256xf32> to vector<8x256xf32>
    %217 = arith.mulf %209, %216 : vector<8x256xf32>
    %218 = vector.extract_strided_slice %127 {offsets = [2, 0], sizes = [1, 256], strides = [1, 1]} : vector<8x256xf32> to vector<1x256xf32>
    %219 = vector.extract_strided_slice %127 {offsets = [3, 0], sizes = [1, 256], strides = [1, 1]} : vector<8x256xf32> to vector<1x256xf32>
    %220 = arith.maximumf %218, %219 : vector<1x256xf32>
    %221 = vector.broadcast %220 : vector<1x256xf32> to vector<8x256xf32>
    %222 = arith.mulf %210, %221 : vector<8x256xf32>
    %223 = arith.addf %217, %222 : vector<8x256xf32>
    %224 = vector.extract_strided_slice %127 {offsets = [4, 0], sizes = [1, 256], strides = [1, 1]} : vector<8x256xf32> to vector<1x256xf32>
    %225 = vector.extract_strided_slice %127 {offsets = [5, 0], sizes = [1, 256], strides = [1, 1]} : vector<8x256xf32> to vector<1x256xf32>
    %226 = arith.maximumf %224, %225 : vector<1x256xf32>
    %227 = vector.broadcast %226 : vector<1x256xf32> to vector<8x256xf32>
    %228 = arith.mulf %211, %227 : vector<8x256xf32>
    %229 = arith.addf %223, %228 : vector<8x256xf32>
    %230 = vector.extract_strided_slice %127 {offsets = [6, 0], sizes = [1, 256], strides = [1, 1]} : vector<8x256xf32> to vector<1x256xf32>
    %231 = vector.extract_strided_slice %127 {offsets = [7, 0], sizes = [1, 256], strides = [1, 1]} : vector<8x256xf32> to vector<1x256xf32>
    %232 = arith.maximumf %230, %231 : vector<1x256xf32>
    %233 = vector.broadcast %232 : vector<1x256xf32> to vector<8x256xf32>
    %234 = arith.mulf %212, %233 : vector<8x256xf32>
    %235 = arith.addf %229, %234 : vector<8x256xf32>
    %236 = vector.extract_strided_slice %145 {offsets = [0, 0], sizes = [1, 256], strides = [1, 1]} : vector<8x256xf32> to vector<1x256xf32>
    %237 = vector.extract_strided_slice %145 {offsets = [1, 0], sizes = [1, 256], strides = [1, 1]} : vector<8x256xf32> to vector<1x256xf32>
    %238 = arith.maximumf %236, %237 : vector<1x256xf32>
    %239 = vector.broadcast %238 : vector<1x256xf32> to vector<8x256xf32>
    %240 = arith.mulf %209, %239 : vector<8x256xf32>
    %241 = vector.extract_strided_slice %145 {offsets = [2, 0], sizes = [1, 256], strides = [1, 1]} : vector<8x256xf32> to vector<1x256xf32>
    %242 = vector.extract_strided_slice %145 {offsets = [3, 0], sizes = [1, 256], strides = [1, 1]} : vector<8x256xf32> to vector<1x256xf32>
    %243 = arith.maximumf %241, %242 : vector<1x256xf32>
    %244 = vector.broadcast %243 : vector<1x256xf32> to vector<8x256xf32>
    %245 = arith.mulf %210, %244 : vector<8x256xf32>
    %246 = arith.addf %240, %245 : vector<8x256xf32>
    %247 = vector.extract_strided_slice %145 {offsets = [4, 0], sizes = [1, 256], strides = [1, 1]} : vector<8x256xf32> to vector<1x256xf32>
    %248 = vector.extract_strided_slice %145 {offsets = [5, 0], sizes = [1, 256], strides = [1, 1]} : vector<8x256xf32> to vector<1x256xf32>
    %249 = arith.maximumf %247, %248 : vector<1x256xf32>
    %250 = vector.broadcast %249 : vector<1x256xf32> to vector<8x256xf32>
    %251 = arith.mulf %211, %250 : vector<8x256xf32>
    %252 = arith.addf %246, %251 : vector<8x256xf32>
    %253 = vector.extract_strided_slice %145 {offsets = [6, 0], sizes = [1, 256], strides = [1, 1]} : vector<8x256xf32> to vector<1x256xf32>
    %254 = vector.extract_strided_slice %145 {offsets = [7, 0], sizes = [1, 256], strides = [1, 1]} : vector<8x256xf32> to vector<1x256xf32>
    %255 = arith.maximumf %253, %254 : vector<1x256xf32>
    %256 = vector.broadcast %255 : vector<1x256xf32> to vector<8x256xf32>
    %257 = arith.mulf %212, %256 : vector<8x256xf32>
    %258 = arith.addf %252, %257 : vector<8x256xf32>
    %c24 = arith.constant 24 : index
    %259 = memref.load %arg1[%c24] : memref<42xf32, #tpu.memory_space<smem>>
    %260 = vector.broadcast %259 : f32 to vector<8x256xf32>
    %261 = arith.mulf %235, %260 : vector<8x256xf32>
    %c25 = arith.constant 25 : index
    %262 = memref.load %arg1[%c25] : memref<42xf32, #tpu.memory_space<smem>>
    %263 = vector.broadcast %262 : f32 to vector<8x256xf32>
    %264 = arith.mulf %258, %263 : vector<8x256xf32>
    %265 = arith.addf %261, %264 : vector<8x256xf32>
    %c38 = arith.constant 38 : index
    %266 = memref.load %arg1[%c38] : memref<42xf32, #tpu.memory_space<smem>>
    %267 = vector.broadcast %266 : f32 to vector<8x256xf32>
    %268 = arith.addf %265, %267 : vector<8x256xf32>
    %c0_24 = arith.constant 0 : index
    %c0_25 = arith.constant 0 : index
    %269 = arith.index_cast %1 : i32 to index
    %270 = vector.load %arg2[%c0_24, %c0_25, %269] : memref<4x8x256xf32, #tpu.memory_space<vmem>>, vector<1x8x256xf32>
    %271 = vector.shape_cast %270 : vector<1x8x256xf32> to vector<8x256xf32>
    %272 = arith.addf %268, %271 : vector<8x256xf32>
    %c0_26 = arith.constant 0 : index
    %c0_27 = arith.constant 0 : index
    %273 = arith.index_cast %1 : i32 to index
    %274 = vector.load %arg3[%c0_26, %c0_27, %273] : memref<4x8x256xf32, #tpu.memory_space<vmem>>, vector<1x8x256xf32>
    %275 = vector.shape_cast %274 : vector<1x8x256xf32> to vector<8x256xf32>
    %276 = vector.shape_cast %272 : vector<8x256xf32> to vector<1x8x256xf32>
    tpu.vector_store %arg3[%c0_26, %c0_27, %273], %276 {strides = array<i32>} : memref<4x8x256xf32, #tpu.memory_space<vmem>>, vector<1x8x256xf32>,
    %c26 = arith.constant 26 : index
    %277 = memref.load %arg1[%c26] : memref<42xf32, #tpu.memory_space<smem>>
    %278 = vector.broadcast %277 : f32 to vector<8x256xf32>
    %279 = arith.mulf %235, %278 : vector<8x256xf32>
    %c27 = arith.constant 27 : index
    %280 = memref.load %arg1[%c27] : memref<42xf32, #tpu.memory_space<smem>>
    %281 = vector.broadcast %280 : f32 to vector<8x256xf32>
    %282 = arith.mulf %258, %281 : vector<8x256xf32>
    %283 = arith.addf %279, %282 : vector<8x256xf32>
    %c39 = arith.constant 39 : index
    %284 = memref.load %arg1[%c39] : memref<42xf32, #tpu.memory_space<smem>>
    %285 = vector.broadcast %284 : f32 to vector<8x256xf32>
    %286 = arith.addf %283, %285 : vector<8x256xf32>
    %c1_28 = arith.constant 1 : index
    %c0_29 = arith.constant 0 : index
    %287 = arith.index_cast %1 : i32 to index
    %288 = vector.load %arg2[%c1_28, %c0_29, %287] : memref<4x8x256xf32, #tpu.memory_space<vmem>>, vector<1x8x256xf32>
    %289 = vector.shape_cast %288 : vector<1x8x256xf32> to vector<8x256xf32>
    %290 = arith.addf %286, %289 : vector<8x256xf32>
    %c1_30 = arith.constant 1 : index
    %c0_31 = arith.constant 0 : index
    %291 = arith.index_cast %1 : i32 to index
    %292 = vector.load %arg3[%c1_30, %c0_31, %291] : memref<4x8x256xf32, #tpu.memory_space<vmem>>, vector<1x8x256xf32>
    %293 = vector.shape_cast %292 : vector<1x8x256xf32> to vector<8x256xf32>
    %294 = vector.shape_cast %290 : vector<8x256xf32> to vector<1x8x256xf32>
    tpu.vector_store %arg3[%c1_30, %c0_31, %291], %294 {strides = array<i32>} : memref<4x8x256xf32, #tpu.memory_space<vmem>>, vector<1x8x256xf32>,
    %c28 = arith.constant 28 : index
    %295 = memref.load %arg1[%c28] : memref<42xf32, #tpu.memory_space<smem>>
    %296 = vector.broadcast %295 : f32 to vector<8x256xf32>
    %297 = arith.mulf %235, %296 : vector<8x256xf32>
    %c29 = arith.constant 29 : index
    %298 = memref.load %arg1[%c29] : memref<42xf32, #tpu.memory_space<smem>>
    %299 = vector.broadcast %298 : f32 to vector<8x256xf32>
    %300 = arith.mulf %258, %299 : vector<8x256xf32>
    %301 = arith.addf %297, %300 : vector<8x256xf32>
    %c40 = arith.constant 40 : index
    %302 = memref.load %arg1[%c40] : memref<42xf32, #tpu.memory_space<smem>>
    %303 = vector.broadcast %302 : f32 to vector<8x256xf32>
    %304 = arith.addf %301, %303 : vector<8x256xf32>
    %c2_32 = arith.constant 2 : index
    %c0_33 = arith.constant 0 : index
    %305 = arith.index_cast %1 : i32 to index
    %306 = vector.load %arg2[%c2_32, %c0_33, %305] : memref<4x8x256xf32, #tpu.memory_space<vmem>>, vector<1x8x256xf32>
    %307 = vector.shape_cast %306 : vector<1x8x256xf32> to vector<8x256xf32>
    %308 = arith.addf %304, %307 : vector<8x256xf32>
    %c2_34 = arith.constant 2 : index
    %c0_35 = arith.constant 0 : index
    %309 = arith.index_cast %1 : i32 to index
    %310 = vector.load %arg3[%c2_34, %c0_35, %309] : memref<4x8x256xf32, #tpu.memory_space<vmem>>, vector<1x8x256xf32>
    %311 = vector.shape_cast %310 : vector<1x8x256xf32> to vector<8x256xf32>
    %312 = vector.shape_cast %308 : vector<8x256xf32> to vector<1x8x256xf32>
    tpu.vector_store %arg3[%c2_34, %c0_35, %309], %312 {strides = array<i32>} : memref<4x8x256xf32, #tpu.memory_space<vmem>>, vector<1x8x256xf32>,
    %c30 = arith.constant 30 : index
    %313 = memref.load %arg1[%c30] : memref<42xf32, #tpu.memory_space<smem>>
    %314 = vector.broadcast %313 : f32 to vector<8x256xf32>
    %315 = arith.mulf %235, %314 : vector<8x256xf32>
    %c31 = arith.constant 31 : index
    %316 = memref.load %arg1[%c31] : memref<42xf32, #tpu.memory_space<smem>>
    %317 = vector.broadcast %316 : f32 to vector<8x256xf32>
    %318 = arith.mulf %258, %317 : vector<8x256xf32>
    %319 = arith.addf %315, %318 : vector<8x256xf32>
    %c41 = arith.constant 41 : index
    %320 = memref.load %arg1[%c41] : memref<42xf32, #tpu.memory_space<smem>>
    %321 = vector.broadcast %320 : f32 to vector<8x256xf32>
    %322 = arith.addf %319, %321 : vector<8x256xf32>
    %c3_36 = arith.constant 3 : index
    %c0_37 = arith.constant 0 : index
    %323 = arith.index_cast %1 : i32 to index
    %324 = vector.load %arg2[%c3_36, %c0_37, %323] : memref<4x8x256xf32, #tpu.memory_space<vmem>>, vector<1x8x256xf32>
    %325 = vector.shape_cast %324 : vector<1x8x256xf32> to vector<8x256xf32>
    %326 = arith.addf %322, %325 : vector<8x256xf32>
    %c3_38 = arith.constant 3 : index
    %c0_39 = arith.constant 0 : index
    %327 = arith.index_cast %1 : i32 to index
    %328 = vector.load %arg3[%c3_38, %c0_39, %327] : memref<4x8x256xf32, #tpu.memory_space<vmem>>, vector<1x8x256xf32>
    %329 = vector.shape_cast %328 : vector<1x8x256xf32> to vector<8x256xf32>
    %330 = vector.shape_cast %326 : vector<8x256xf32> to vector<1x8x256xf32>
    tpu.vector_store %arg3[%c3_38, %c0_39, %327], %330 {strides = array<i32>} : memref<4x8x256xf32, #tpu.memory_space<vmem>>, vector<1x8x256xf32>,
    %c1_i32 = arith.constant 1 : i32
    return
  }
  func.func @transform_0(%arg0: i32) -> i32 {
    %c0_i32 = arith.constant 0 : i32
    %c0_i32_0 = arith.constant 0 : i32
    return %c0_i32 : i32
  }
  func.func @transform_1(%arg0: i32) -> (i32, i32, i32) {
    %c0_i32 = arith.constant 0 : i32
    %c0_i32_0 = arith.constant 0 : i32
    %c0_i32_1 = arith.constant 0 : i32
    return %c0_i32, %c0_i32_0, %arg0 : i32, i32, i32
  }
  func.func @transform_2(%arg0: i32) -> (i32, i32, i32) {
    %c0_i32 = arith.constant 0 : i32
    %c0_i32_0 = arith.constant 0 : i32
    %c0_i32_1 = arith.constant 0 : i32
    return %c0_i32, %c0_i32_0, %arg0 : i32, i32, i32
  }
}

</mosaic_0001>

<llo_original>
// kernel: nonlocal_block.1
$region0: #{nonlocal_block.1}
  #allocation0 [shape = 'u32[]', space=smem, size = 0x4, offset = 0x4, fixed_abs, tag = 'smem constant byte address 0x4 - core index']
  #allocation1 [shape = 'u32[144,128]{1,0:T(1,128)}', space=vmem, size = 0x12000, scoped, tag = 'internal scratch']
  %s0 = inlined_call_operand.vmem [shape: f32[42], index: 0, kind: input, shape index: {}]
  %s1 = inlined_call_operand.vmem [shape: f32[4,8,512], index: 1, kind: input, shape index: {}]
  %s2 = inlined_call_operand.vmem [shape: f32[4,8,512], index: 2, kind: output, shape index: {}]
  %s3 = sld [smem:[#allocation0]]
  $region87: #{nonlocal_block.1} parent=0
    _
  %s5 = ssub.s32 1, %s3
  %s6 = scalar_select 0, %s5, %s3
  $region1: #{nonlocal_block.1} parent=0
    #allocation2 [shape = 'u8[512]{0}', space=smem, size = 0x200, scoped, tag = 'input window, operand 0, single buffered']
    #allocation3 [shape = 's32[2]{0}', space=sflag, size = 0x8, scoped, tag = 'scoped memory for nonlocal_block.1']
    #allocation4 [shape = 'u8[65536]{0}', space=vmem, size = 0x10000, scoped, tag = 'input window, operand 1']
    #allocation5 [shape = 'u8[65536]{0}', space=vmem, size = 0x10000, scoped, tag = 'output window, operand 0']
    %7 = vsyncpa [#allocation3], 0
    loop: start=0, step=1, limit=4
    $region2: #{nonlocal_block.1} parent=1 // loop_pre_header
      _
    $region3: #{nonlocal_block.1} parent=1 // loop_header
      %s9 = sphi 0, %s13
      %p10 = scmp.ge.s32.totalorder %s9, 4
      %s17 = sphi 0, %s17
      %s19 = sphi 0, %s17
      %s20 = sphi 0, %s19
      %s34 = sphi 0, %s20
      %s40 = sphi 0, %s42
      %s43 = sphi 0, %s40
      %s44 = sphi 0, %s43
      %s60 = sphi 0, %s44
      %s66 = sphi 0, %s68
      %s69 = sphi 0, %s66
      %s70 = sphi 0, %s69
      %s86 = sphi 0, %s70
    $region4: #{nonlocal_block.1} parent=1 // loop_header_branch
      %12 = sbr.rel (%p10) target = $region8
    $region5: #{nonlocal_block.1} parent=1 // loop_body
      %s14 = ssub.s32 %s9, 1
      %s15 = ssub.s32 %s9, 2
      %s16 = sadd.s32 %s9, 1
      %s18 = sadd.s32 %s17, 1
      %p21 = scmp.eq.s32.totalorder %s9, 1
      %p22 = scmp.ne.s32.totalorder %s17, %s19
      %p23 = scmp.eq.s32.totalorder %s9, 0
      %p24 = por %p22, %p23
      %p25 = scmp.ne.s32.totalorder %s17, %s19
      %p26 = scmp.eq.s32.totalorder %s14, 1
      %p27 = por %p25, %p26
      %p28 = scmp.ne.s32.totalorder %s19, %s20
      %p29 = scmp.eq.s32.totalorder %s14, 0
      %p30 = por %p28, %p29
      %p31 = scmp.ne.s32.totalorder %s19, %s20
      %p32 = scmp.eq.s32.totalorder %s15, 1
      %p33 = por %p31, %p32
      %p35 = scmp.ne.s32.totalorder %s20, %s34
      %p36 = scmp.eq.s32.totalorder %s15, 0
      %p37 = por %p35, %p36
      %s38 = ssub.s32 %s9, %s16
      %p39 = scmp.eq.s32.totalorder %s38, 0
      %s41 = sadd.s32 %s40, 1
      %s42 = scalar_select %p39, %s40, %s41
      %p45 = pneg %p39
      %p46 = scmp.eq.s32.totalorder %s9, 1
      %p47 = por %p45, %p46
      %p48 = scmp.ne.s32.totalorder %s40, %s43
      %p49 = scmp.eq.s32.totalorder %s9, 0
      %p50 = por %p48, %p49
      %p51 = scmp.ne.s32.totalorder %s40, %s43
      %p52 = scmp.eq.s32.totalorder %s14, 1
      %p53 = por %p51, %p52
      %p54 = scmp.ne.s32.totalorder %s43, %s44
      %p55 = scmp.eq.s32.totalorder %s14, 0
      %p56 = por %p54, %p55
      %p57 = scmp.ne.s32.totalorder %s43, %s44
      %p58 = scmp.eq.s32.totalorder %s15, 1
      %p59 = por %p57, %p58
      %p61 = scmp.ne.s32.totalorder %s44, %s60
      %p62 = scmp.eq.s32.totalorder %s15, 0
      %p63 = por %p61, %p62
      %s64 = ssub.s32 %s9, %s16
      %p65 = scmp.eq.s32.totalorder %s64, 0
      %s67 = sadd.s32 %s66, 1
      %s68 = scalar_select %p65, %s66, %s67
      %p71 = pneg %p65
      %p72 = scmp.eq.s32.totalorder %s9, 1
      %p73 = por %p71, %p72
      %p74 = scmp.ne.s32.totalorder %s66, %s69
      %p75 = scmp.eq.s32.totalorder %s9, 0
      %p76 = por %p74, %p75
      %p77 = scmp.ne.s32.totalorder %s66, %s69
      %p78 = scmp.eq.s32.totalorder %s14, 1
      %p79 = por %p77, %p78
      %p80 = scmp.ne.s32.totalorder %s69, %s70
      %p81 = scmp.eq.s32.totalorder %s14, 0
      %p82 = por %p80, %p81
      %p83 = scmp.ne.s32.totalorder %s69, %s70
      %p84 = scmp.eq.s32.totalorder %s15, 1
      %p85 = por %p83, %p84
      %p87 = scmp.ne.s32.totalorder %s70, %s86
      %p88 = scmp.eq.s32.totalorder %s15, 0
      %p89 = por %p87, %p88
      %p90 = scmp.le.s32.totalorder 1, %s9
      %p91 = scmp.lt.s32.totalorder %s9, 3
      %p92 = pnand %p90, %p91
      %p93 = pneg %p92
      // Predicated region
      $region9: #{nonlocal_block.1} parent=5 // pred_check
        _
      $region10: #{nonlocal_block.1} parent=5 // pred_check_branch
        %95 = sbr.rel (%p92) target = $region12
      $region11: #{nonlocal_block.1} parent=5 // pred_region
        %s96 = ssub.s32 %s9, 1
        // Predicated region
        $region13: #{nonlocal_block.1} parent=11 // pred_check
          %p97 = pneg %p30
        $region14: #{nonlocal_block.1} parent=11 // pred_check_branch
          %99 = sbr.rel (%p97) target = $region16
        $region15: #{nonlocal_block.1} parent=11 // pred_region
          %s101 = ssub.s32 16, 16
          %102 = vsyncadd [#allocation3], %s101
          %s104 = sshll.u32 %s0, 4
          %s105 = int_to_ptr.vmem [resolvable:$true] %s104
          %107 = dma.vmem_to_smem %s105, 16, [#allocation2], [#allocation3]
        $region16: #{nonlocal_block.1} parent=11 // pred_fallthru
          _
      $region12: #{nonlocal_block.1} parent=5 // pred_fallthru
        _
      %p108 = scmp.lt.s32.totalorder %s9, 2
      // Predicated region
      $region17: #{nonlocal_block.1} parent=5 // pred_check
        %p109 = pneg %p108
      $region18: #{nonlocal_block.1} parent=5 // pred_check_branch
        %111 = sbr.rel (%p109) target = $region20
      $region19: #{nonlocal_block.1} parent=5 // pred_region
        // Predicated region
        $region21: #{nonlocal_block.1} parent=19 // pred_check
          %p112 = pneg %p50
        $region22: #{nonlocal_block.1} parent=19 // pred_check_branch
          %114 = sbr.rel (%p112) target = $region24
        $region23: #{nonlocal_block.1} parent=19 // pred_region
          %s115 = sand.u32 %s40, 1
          %s116 = sand.u32 %s40, 1
          %s117 = smul.addr %s116, 64
          %s118 = scalar_lea.vmem [#allocation4], %s117
          %s119 = smul.u32 2, %s9
          %s120 = smul.addr %s119, 8
          %s121 = scalar_lea.vmem %s1, %s120
          // Predicated region
          $region25: #{nonlocal_block.1} parent=23 // pred_check
            _
          $region26: #{nonlocal_block.1} parent=23 // pred_check_branch
            %123 = sbr.rel (0) target = $region28
          $region27: #{nonlocal_block.1} parent=23 // pred_region
            // Predicated region
            $region29: #{nonlocal_block.1} parent=27 // pred_check
              _
            $region30: #{nonlocal_block.1} parent=27 // pred_check_branch
              %125 = sbr.rel (0) target = $region32
            $region31: #{nonlocal_block.1} parent=27 // pred_region
              loop: start=0, step=1, limit=1
              $region33: #{nonlocal_block.1} parent=31 // loop_pre_header
                _
              $region34: #{nonlocal_block.1} parent=31 // loop_header
                %s127 = sphi 0, %s131
                %p128 = scmp.ge.s32.totalorder %s127, 1
                %s132 = sphi %s121, %s121
                %s133 = sphi %s118, %s118
              $region35: #{nonlocal_block.1} parent=31 // loop_header_branch
                %130 = sbr.rel (%p128) target = $region39
              $region36: #{nonlocal_block.1} parent=31 // loop_body
                %v134 = vld [vmem:[%s132] sm:$0xff]
                %135 = vst [vmem:[%s133] sm:$0xff] %v134
                %v136 = vld [vmem:[%s132 + $0x8] sm:$0xff]
                %137 = vst [vmem:[%s133 + $0x8] sm:$0xff] %v136
                %v138 = vld [vmem:[%s132 + $0x20] sm:$0xff]
                %139 = vst [vmem:[%s133 + $0x10] sm:$0xff] %v138
                %v140 = vld [vmem:[%s132 + $0x28] sm:$0xff]
                %141 = vst [vmem:[%s133 + $0x18] sm:$0xff] %v140
                %v142 = vld [vmem:[%s132 + $0x40] sm:$0xff]
                %143 = vst [vmem:[%s133 + $0x20] sm:$0xff] %v142
                %v144 = vld [vmem:[%s132 + $0x48] sm:$0xff]
                %145 = vst [vmem:[%s133 + $0x28] sm:$0xff] %v144
                %v146 = vld [vmem:[%s132 + $0x60] sm:$0xff]
                %147 = vst [vmem:[%s133 + $0x30] sm:$0xff] %v146
                %v148 = vld [vmem:[%s132 + $0x68] sm:$0xff]
                %149 = vst [vmem:[%s133 + $0x38] sm:$0xff] %v148
              $region37: #{nonlocal_block.1} parent=31 // loop_footer
                %s131 = sadd.s32 1, %s127
              $region38: #{nonlocal_block.1} parent=31 // loop_footer_branch
                %126 = sbr.rel target = $region34
              $region39: #{nonlocal_block.1} parent=31 // loop_exit
                _
            $region32: #{nonlocal_block.1} parent=27 // pred_fallthru
              _
            // Predicated region
            $region40: #{nonlocal_block.1} parent=27 // pred_check
              _
            $region41: #{nonlocal_block.1} parent=27 // pred_check_branch
              %151 = sbr.rel target = $region43
            $region42: #{nonlocal_block.1} parent=27 // pred_region
              _
            $region43: #{nonlocal_block.1} parent=27 // pred_fallthru
              _
          $region28: #{nonlocal_block.1} parent=23 // pred_fallthru
            _
          %152 = vnop
        $region24: #{nonlocal_block.1} parent=19 // pred_fallthru
          _
      $region20: #{nonlocal_block.1} parent=5 // pred_fallthru
        _
      %p153 = scmp.le.s32.totalorder 1, %s9
      %p154 = scmp.lt.s32.totalorder %s9, 3
      %p155 = pnand %p153, %p154
      %p156 = pneg %p155
      // Predicated region
      $region44: #{nonlocal_block.1} parent=5 // pred_check
        _
      $region45: #{nonlocal_block.1} parent=5 // pred_check_branch
        %158 = sbr.rel (%p155) target = $region47
      $region46: #{nonlocal_block.1} parent=5 // pred_region
        %s159 = ssub.s32 %s9, 1
        // Predicated region
        $region48: #{nonlocal_block.1} parent=46 // pred_check
          %p160 = pneg %p30
        $region49: #{nonlocal_block.1} parent=46 // pred_check_branch
          %162 = sbr.rel (%p160) target = $region51
        $region50: #{nonlocal_block.1} parent=46 // pred_region
          %163 = dma.done [#allocation3], 16
        $region51: #{nonlocal_block.1} parent=46 // pred_fallthru
          _
        %s164 = sand.u32 %s43, 1
        %s165 = sand.u32 %s43, 1
        %s166 = smul.addr %s165, 64
        %s167 = scalar_lea.vmem [#allocation4], %s166
        // Predicated region
        $region52: #{nonlocal_block.1} parent=46 // pred_check
          %p168 = pneg %p56
        $region53: #{nonlocal_block.1} parent=46 // pred_check_branch
          %170 = sbr.rel (%p168) target = $region55
        $region54: #{nonlocal_block.1} parent=46 // pred_region
          _
        $region55: #{nonlocal_block.1} parent=46 // pred_fallthru
          _
        %171 = sfence
        %p172 = pneg %p30
        %p173 = pneg %p27
        %s174 = sand.u32 %s43, 1
        %s175 = sand.u32 %s43, 1
        %s176 = smul.addr %s175, 64
        %s177 = scalar_lea.vmem [#allocation4], %s176
        %p178 = pneg %p56
        %p179 = pneg %p53
        %p180 = pneg %p82
        %p181 = pneg %p79
        %s182 = sand.u32 %s69, 1
        %s183 = sand.u32 %s69, 1
        %s184 = smul.addr %s183, 64
        %s185 = scalar_lea.vmem [#allocation5], %s184
        %s186 = smul.u32 2, %s14
        %s187 = smul.u32 2, %s14
        %v188 = vld [vmem:[%s167] sm:$0xff]
        %v189 = vld [vmem:[%s167 + $0x8] sm:$0xff]
        %s190 = sadd.s32 0, 2
        %s191 = smul.addr %s190, 8
        %s192 = scalar_lea.vmem %s167, %s191 [#allocation4]
        %v193 = vld [vmem:[%s192] sm:$0xff]
        %v194 = vld [vmem:[%s192 + $0x8] sm:$0xff]
        %s195 = sadd.s32 0, 4
        %s196 = smul.addr %s195, 8
        %s197 = scalar_lea.vmem %s167, %s196 [#allocation4]
        %v198 = vld [vmem:[%s197] sm:$0xff]
        %v199 = vld [vmem:[%s197 + $0x8] sm:$0xff]
        %s200 = sadd.s32 0, 6
        %s201 = smul.addr %s200, 8
        %s202 = scalar_lea.vmem %s167, %s201 [#allocation4]
        %v203 = vld [vmem:[%s202] sm:$0xff]
        %v204 = vld [vmem:[%s202 + $0x8] sm:$0xff]
        %s205 = sld [smem:[#allocation2]]
        %v206 = vstv %s205
        %v207 = vmul.f32 %v206, %v188
        %v208 = vmul.f32 %v206, %v189
        %s209 = sld [smem:[#allocation2 + $0x1]]
        %v210 = vstv %s209
        %v211 = vmul.f32 %v210, %v193
        %v212 = vmul.f32 %v210, %v194
        %v213 = vadd.f32 %v207, %v211
        %v214 = vadd.f32 %v208, %v212
        %s215 = sld [smem:[#allocation2 + $0x2]]
        %v216 = vstv %s215
        %v217 = vmul.f32 %v216, %v198
        %v218 = vmul.f32 %v216, %v199
        %v219 = vadd.f32 %v213, %v217
        %v220 = vadd.f32 %v214, %v218
        %s221 = sld [smem:[#allocation2 + $0x3]]
        %v222 = vstv %s221
        %v223 = vmul.f32 %v222, %v203
        %v224 = vmul.f32 %v222, %v204
        %v225 = vadd.f32 %v219, %v223
        %v226 = vadd.f32 %v220, %v224
        %s227 = sld [smem:[#allocation2 + $0x20]]
        %v228 = vstv %s227
        %v229 = vadd.f32 %v225, %v228
        %v230 = vadd.f32 %v226, %v228
        %s231 = sld [smem:[#allocation2 + $0x4]]
        %v232 = vstv %s231
        %v233 = vmul.f32 %v232, %v188
        %v234 = vmul.f32 %v232, %v189
        %s235 = sld [smem:[#allocation2 + $0x5]]
        %v236 = vstv %s235
        %v237 = vmul.f32 %v236, %v193
        %v238 = vmul.f32 %v236, %v194
        %v239 = vadd.f32 %v233, %v237
        %v240 = vadd.f32 %v234, %v238
        %s241 = sld [smem:[#allocation2 + $0x6]]
        %v242 = vstv %s241
        %v243 = vmul.f32 %v242, %v198
        %v244 = vmul.f32 %v242, %v199
        %v245 = vadd.f32 %v239, %v243
        %v246 = vadd.f32 %v240, %v244
        %s247 = sld [smem:[#allocation2 + $0x7]]
        %v248 = vstv %s247
        %v249 = vmul.f32 %v248, %v203
        %v250 = vmul.f32 %v248, %v204
        %v251 = vadd.f32 %v245, %v249
        %v252 = vadd.f32 %v246, %v250
        %s253 = sld [smem:[#allocation2 + $0x21]]
        %v254 = vstv %s253
        %v255 = vadd.f32 %v251, %v254
        %v256 = vadd.f32 %v252, %v254
        %s257 = sld [smem:[#allocation2 + $0x8]]
        %v258 = vstv %s257
        %v259 = vmul.f32 %v258, %v188
        %v260 = vmul.f32 %v258, %v189
        %s261 = sld [smem:[#allocation2 + $0x9]]
        %v262 = vstv %s261
        %v263 = vmul.f32 %v262, %v193
        %v264 = vmul.f32 %v262, %v194
        %v265 = vadd.f32 %v259, %v263
        %v266 = vadd.f32 %v260, %v264
        %s267 = sld [smem:[#allocation2 + $0xa]]
        %v268 = vstv %s267
        %v269 = vmul.f32 %v268, %v198
        %v270 = vmul.f32 %v268, %v199
        %v271 = vadd.f32 %v265, %v269
        %v272 = vadd.f32 %v266, %v270
        %s273 = sld [smem:[#allocation2 + $0xb]]
        %v274 = vstv %s273
        %v275 = vmul.f32 %v274, %v203
        %v276 = vmul.f32 %v274, %v204
        %v277 = vadd.f32 %v271, %v275
        %v278 = vadd.f32 %v272, %v276
        %s279 = sld [smem:[#allocation2 + $0x22]]
        %v280 = vstv %s279
        %v281 = vadd.f32 %v277, %v280
        %v282 = vadd.f32 %v278, %v280
        %s283 = sld [smem:[#allocation2 + $0xc]]
        %v284 = vstv %s283
        %v285 = vmul.f32 %v284, %v188
        %v286 = vmul.f32 %v284, %v189
        %s287 = sld [smem:[#allocation2 + $0xd]]
        %v288 = vstv %s287
        %v289 = vmul.f32 %v288, %v193
        %v290 = vmul.f32 %v288, %v194
        %v291 = vadd.f32 %v285, %v289
        %v292 = vadd.f32 %v286, %v290
        %s293 = sld [smem:[#allocation2 + $0xe]]
        %v294 = vstv %s293
        %v295 = vmul.f32 %v294, %v198
        %v296 = vmul.f32 %v294, %v199
        %v297 = vadd.f32 %v291, %v295
        %v298 = vadd.f32 %v292, %v296
        %s299 = sld [smem:[#allocation2 + $0xf]]
        %v300 = vstv %s299
        %v301 = vmul.f32 %v300, %v203
        %v302 = vmul.f32 %v300, %v204
        %v303 = vadd.f32 %v297, %v301
        %v304 = vadd.f32 %v298, %v302
        %s305 = sld [smem:[#allocation2 + $0x23]]
        %v306 = vstv %s305
        %v307 = vadd.f32 %v303, %v306
        %v308 = vadd.f32 %v304, %v306
        %s309 = sld [smem:[#allocation2 + $0x10]]
        %v310 = vstv %s309
        %v311 = vmul.f32 %v310, %v188
        %v312 = vmul.f32 %v310, %v189
        %s313 = sld [smem:[#allocation2 + $0x11]]
        %v314 = vstv %s313
        %v315 = vmul.f32 %v314, %v193
        %v316 = vmul.f32 %v314, %v194
        %v317 = vadd.f32 %v311, %v315
        %v318 = vadd.f32 %v312, %v316
        %s319 = sld [smem:[#allocation2 + $0x12]]
        %v320 = vstv %s319
        %v321 = vmul.f32 %v320, %v198
        %v322 = vmul.f32 %v320, %v199
        %v323 = vadd.f32 %v317, %v321
        %v324 = vadd.f32 %v318, %v322
        %s325 = sld [smem:[#allocation2 + $0x13]]
        %v326 = vstv %s325
        %v327 = vmul.f32 %v326, %v203
        %v328 = vmul.f32 %v326, %v204
        %v329 = vadd.f32 %v323, %v327
        %v330 = vadd.f32 %v324, %v328
        %s331 = sld [smem:[#allocation2 + $0x24]]
        %v332 = vstv %s331
        %v333 = vadd.f32 %v329, %v332
        %v334 = vadd.f32 %v330, %v332
        %s335 = sld [smem:[#allocation2 + $0x14]]
        %v336 = vstv %s335
        %v337 = vmul.f32 %v336, %v188
        %v338 = vmul.f32 %v336, %v189
        %s339 = sld [smem:[#allocation2 + $0x15]]
        %v340 = vstv %s339
        %v341 = vmul.f32 %v340, %v193
        %v342 = vmul.f32 %v340, %v194
        %v343 = vadd.f32 %v337, %v341
        %v344 = vadd.f32 %v338, %v342
        %s345 = sld [smem:[#allocation2 + $0x16]]
        %v346 = vstv %s345
        %v347 = vmul.f32 %v346, %v198
        %v348 = vmul.f32 %v346, %v199
        %v349 = vadd.f32 %v343, %v347
        %v350 = vadd.f32 %v344, %v348
        %s351 = sld [smem:[#allocation2 + $0x17]]
        %v352 = vstv %s351
        %v353 = vmul.f32 %v352, %v203
        %v354 = vmul.f32 %v352, %v204
        %v355 = vadd.f32 %v349, %v353
        %v356 = vadd.f32 %v350, %v354
        %s357 = sld [smem:[#allocation2 + $0x25]]
        %v358 = vstv %s357
        %v359 = vadd.f32 %v355, %v358
        %v360 = vadd.f32 %v356, %v358
        %v363 = vrot.slane %v281, 1
        %v364 = vrot.slane %v282, 1
        %v367 = vmax.f32 %v281, %v363
        %v368 = vmax.f32 %v282, %v364
        %v369 = vlaneseq
        %v370 = vshrl.u32 %v369, 7
        %v371 = vsub.s32 0, %v370
        %v372 = vrot.slane %v367, %v371
        %v373 = vlaneseq
        %v374 = vshrl.u32 %v373, 7
        %v375 = vsub.s32 0, %v374
        %v376 = vrot.slane %v368, %v375
        %v377 = vmul.f32 %v229, %v372
        %v378 = vmul.f32 %v230, %v376
        %v381 = vrot.slane %v307, 1
        %v382 = vrot.slane %v308, 1
        %v385 = vmax.f32 %v307, %v381
        %v386 = vmax.f32 %v308, %v382
        %v387 = vlaneseq
        %v388 = vshrl.u32 %v387, 7
        %v389 = vsub.s32 0, %v388
        %v390 = vrot.slane %v385, %v389
        %v391 = vlaneseq
        %v392 = vshrl.u32 %v391, 7
        %v393 = vsub.s32 0, %v392
        %v394 = vrot.slane %v386, %v393
        %v395 = vmul.f32 %v255, %v390
        %v396 = vmul.f32 %v256, %v394
        %v397 = vadd.f32 %v377, %v395
        %v398 = vadd.f32 %v378, %v396
        %v399 = vlaneseq
        %v400 = vshrl.u32 %v399, 7
        %v401 = vsub.s32 2, %v400
        %v402 = vrot.slane %v367, %v401
        %v403 = vlaneseq
        %v404 = vshrl.u32 %v403, 7
        %v405 = vsub.s32 2, %v404
        %v406 = vrot.slane %v368, %v405
        %v407 = vmul.f32 %v229, %v402
        %v408 = vmul.f32 %v230, %v406
        %v409 = vlaneseq
        %v410 = vshrl.u32 %v409, 7
        %v411 = vsub.s32 2, %v410
        %v412 = vrot.slane %v385, %v411
        %v413 = vlaneseq
        %v414 = vshrl.u32 %v413, 7
        %v415 = vsub.s32 2, %v414
        %v416 = vrot.slane %v386, %v415
        %v417 = vmul.f32 %v255, %v412
        %v418 = vmul.f32 %v256, %v416
        %v419 = vadd.f32 %v407, %v417
        %v420 = vadd.f32 %v408, %v418
        %v421 = vlaneseq
        %v422 = vshrl.u32 %v421, 7
        %v423 = vsub.s32 4, %v422
        %v424 = vrot.slane %v367, %v423
        %v425 = vlaneseq
        %v426 = vshrl.u32 %v425, 7
        %v427 = vsub.s32 4, %v426
        %v428 = vrot.slane %v368, %v427
        %v429 = vmul.f32 %v229, %v424
        %v430 = vmul.f32 %v230, %v428
        %v431 = vlaneseq
        %v432 = vshrl.u32 %v431, 7
        %v433 = vsub.s32 4, %v432
        %v434 = vrot.slane %v385, %v433
        %v435 = vlaneseq
        %v436 = vshrl.u32 %v435, 7
        %v437 = vsub.s32 4, %v436
        %v438 = vrot.slane %v386, %v437
        %v439 = vmul.f32 %v255, %v434
        %v440 = vmul.f32 %v256, %v438
        %v441 = vadd.f32 %v429, %v439
        %v442 = vadd.f32 %v430, %v440
        %v443 = vlaneseq
        %v444 = vshrl.u32 %v443, 7
        %v445 = vsub.s32 6, %v444
        %v446 = vrot.slane %v367, %v445
        %v447 = vlaneseq
        %v448 = vshrl.u32 %v447, 7
        %v449 = vsub.s32 6, %v448
        %v450 = vrot.slane %v368, %v449
        %v451 = vmul.f32 %v229, %v446
        %v452 = vmul.f32 %v230, %v450
        %v453 = vlaneseq
        %v454 = vshrl.u32 %v453, 7
        %v455 = vsub.s32 6, %v454
        %v456 = vrot.slane %v385, %v455
        %v457 = vlaneseq
        %v458 = vshrl.u32 %v457, 7
        %v459 = vsub.s32 6, %v458
        %v460 = vrot.slane %v386, %v459
        %v461 = vmul.f32 %v255, %v456
        %v462 = vmul.f32 %v256, %v460
        %v463 = vadd.f32 %v451, %v461
        %v464 = vadd.f32 %v452, %v462
        %v465 = vmax.f32 %v397, %v419
        %v466 = vmax.f32 %v398, %v420
        %v467 = vmax.f32 %v465, %v441
        %v468 = vmax.f32 %v466, %v442
        %v469 = vmax.f32 %v467, %v463
        %v470 = vmax.f32 %v468, %v464
        %v471 = vsub.f32 %v397, %v469
        %v472 = vsub.f32 %v398, %v470
        %v473 = vmul.f32 %v471, 1.442695
        %v474 = vpow.pop %v473
        %v475 = vmul.f32 %v472, 1.442695
        %v476 = vpow.pop %v475
        %v477 = vsub.f32 %v419, %v469
        %v478 = vsub.f32 %v420, %v470
        %v479 = vmul.f32 %v477, 1.442695
        %v480 = vpow.pop %v479
        %v481 = vmul.f32 %v478, 1.442695
        %v482 = vpow.pop %v481
        %v483 = vsub.f32 %v441, %v469
        %v484 = vsub.f32 %v442, %v470
        %v485 = vmul.f32 %v483, 1.442695
        %v486 = vpow.pop %v485
        %v487 = vmul.f32 %v484, 1.442695
        %v488 = vpow.pop %v487
        %v489 = vsub.f32 %v463, %v469
        %v490 = vsub.f32 %v464, %v470
        %v491 = vmul.f32 %v489, 1.442695
        %v492 = vpow.pop %v491
        %v493 = vmul.f32 %v490, 1.442695
        %v494 = vpow.pop %v493
        %v495 = vadd.f32 %v474, %v480
        %v496 = vadd.f32 %v476, %v482
        %v497 = vadd.f32 %v495, %v486
        %v498 = vadd.f32 %v496, %v488
        %v499 = vadd.f32 %v497, %v492
        %v500 = vadd.f32 %v498, %v494
        %v501 = vrcp.pop %v499
        %v502 = vrcp.pop %v500
        %v503 = vmul.f32 %v499, %v501
        %v504 = vmul.f32 %v500, %v502
        %v505 = vsub.f32 2.0, %v503
        %v506 = vsub.f32 2.0, %v504
        %v507 = vmul.f32 %v501, %v505
        %v508 = vmul.f32 %v502, %v506
        %v509 = vmul.f32 %v474, %v507
        %v510 = vmul.f32 %v476, %v508
        %v511 = vmul.f32 %v480, %v507
        %v512 = vmul.f32 %v482, %v508
        %v513 = vmul.f32 %v486, %v507
        %v514 = vmul.f32 %v488, %v508
        %v515 = vmul.f32 %v492, %v507
        %v516 = vmul.f32 %v494, %v508
        %v519 = vrot.slane %v333, 1
        %v520 = vrot.slane %v334, 1
        %v523 = vmax.f32 %v333, %v519
        %v524 = vmax.f32 %v334, %v520
        %v525 = vlaneseq
        %v526 = vshrl.u32 %v525, 7
        %v527 = vsub.s32 0, %v526
        %v528 = vrot.slane %v523, %v527
        %v529 = vlaneseq
        %v530 = vshrl.u32 %v529, 7
        %v531 = vsub.s32 0, %v530
        %v532 = vrot.slane %v524, %v531
        %v533 = vmul.f32 %v509, %v528
        %v534 = vmul.f32 %v510, %v532
        %v535 = vlaneseq
        %v536 = vshrl.u32 %v535, 7
        %v537 = vsub.s32 2, %v536
        %v538 = vrot.slane %v523, %v537
        %v539 = vlaneseq
        %v540 = vshrl.u32 %v539, 7
        %v541 = vsub.s32 2, %v540
        %v542 = vrot.slane %v524, %v541
        %v543 = vmul.f32 %v511, %v538
        %v544 = vmul.f32 %v512, %v542
        %v545 = vadd.f32 %v533, %v543
        %v546 = vadd.f32 %v534, %v544
        %v547 = vlaneseq
        %v548 = vshrl.u32 %v547, 7
        %v549 = vsub.s32 4, %v548
        %v550 = vrot.slane %v523, %v549
        %v551 = vlaneseq
        %v552 = vshrl.u32 %v551, 7
        %v553 = vsub.s32 4, %v552
        %v554 = vrot.slane %v524, %v553
        %v555 = vmul.f32 %v513, %v550
        %v556 = vmul.f32 %v514, %v554
        %v557 = vadd.f32 %v545, %v555
        %v558 = vadd.f32 %v546, %v556
        %v559 = vlaneseq
        %v560 = vshrl.u32 %v559, 7
        %v561 = vsub.s32 6, %v560
        %v562 = vrot.slane %v523, %v561
        %v563 = vlaneseq
        %v564 = vshrl.u32 %v563, 7
        %v565 = vsub.s32 6, %v564
        %v566 = vrot.slane %v524, %v565
        %v567 = vmul.f32 %v515, %v562
        %v568 = vmul.f32 %v516, %v566
        %v569 = vadd.f32 %v557, %v567
        %v570 = vadd.f32 %v558, %v568
        %v573 = vrot.slane %v359, 1
        %v574 = vrot.slane %v360, 1
        %v577 = vmax.f32 %v359, %v573
        %v578 = vmax.f32 %v360, %v574
        %v579 = vlaneseq
        %v580 = vshrl.u32 %v579, 7
        %v581 = vsub.s32 0, %v580
        %v582 = vrot.slane %v577, %v581
        %v583 = vlaneseq
        %v584 = vshrl.u32 %v583, 7
        %v585 = vsub.s32 0, %v584
        %v586 = vrot.slane %v578, %v585
        %v587 = vmul.f32 %v509, %v582
        %v588 = vmul.f32 %v510, %v586
        %v589 = vlaneseq
        %v590 = vshrl.u32 %v589, 7
        %v591 = vsub.s32 2, %v590
        %v592 = vrot.slane %v577, %v591
        %v593 = vlaneseq
        %v594 = vshrl.u32 %v593, 7
        %v595 = vsub.s32 2, %v594
        %v596 = vrot.slane %v578, %v595
        %v597 = vmul.f32 %v511, %v592
        %v598 = vmul.f32 %v512, %v596
        %v599 = vadd.f32 %v587, %v597
        %v600 = vadd.f32 %v588, %v598
        %v601 = vlaneseq
        %v602 = vshrl.u32 %v601, 7
        %v603 = vsub.s32 4, %v602
        %v604 = vrot.slane %v577, %v603
        %v605 = vlaneseq
        %v606 = vshrl.u32 %v605, 7
        %v607 = vsub.s32 4, %v606
        %v608 = vrot.slane %v578, %v607
        %v609 = vmul.f32 %v513, %v604
        %v610 = vmul.f32 %v514, %v608
        %v611 = vadd.f32 %v599, %v609
        %v612 = vadd.f32 %v600, %v610
        %v613 = vlaneseq
        %v614 = vshrl.u32 %v613, 7
        %v615 = vsub.s32 6, %v614
        %v616 = vrot.slane %v577, %v615
        %v617 = vlaneseq
        %v618 = vshrl.u32 %v617, 7
        %v619 = vsub.s32 6, %v618
        %v620 = vrot.slane %v578, %v619
        %v621 = vmul.f32 %v515, %v616
        %v622 = vmul.f32 %v516, %v620
        %v623 = vadd.f32 %v611, %v621
        %v624 = vadd.f32 %v612, %v622
        %s625 = sld [smem:[#allocation2 + $0x18]]
        %v626 = vstv %s625
        %v627 = vmul.f32 %v569, %v626
        %v628 = vmul.f32 %v570, %v626
        %s629 = sld [smem:[#allocation2 + $0x19]]
        %v630 = vstv %s629
        %v631 = vmul.f32 %v623, %v630
        %v632 = vmul.f32 %v624, %v630
        %v633 = vadd.f32 %v627, %v631
        %v634 = vadd.f32 %v628, %v632
        %s635 = sld [smem:[#allocation2 + $0x26]]
        %v636 = vstv %s635
        %v637 = vadd.f32 %v633, %v636
        %v638 = vadd.f32 %v634, %v636
        %v639 = vadd.f32 %v637, %v188
        %v640 = vadd.f32 %v638, %v189
        %641 = vst [vmem:[%s185] sm:$0xff] %v639
        %642 = vst [vmem:[%s185 + $0x8] sm:$0xff] %v640
        %s643 = sld [smem:[#allocation2 + $0x1a]]
        %v644 = vstv %s643
        %v645 = vmul.f32 %v569, %v644
        %v646 = vmul.f32 %v570, %v644
        %s647 = sld [smem:[#allocation2 + $0x1b]]
        %v648 = vstv %s647
        %v649 = vmul.f32 %v623, %v648
        %v650 = vmul.f32 %v624, %v648
        %v651 = vadd.f32 %v645, %v649
        %v652 = vadd.f32 %v646, %v650
        %s653 = sld [smem:[#allocation2 + $0x27]]
        %v654 = vstv %s653
        %v655 = vadd.f32 %v651, %v654
        %v656 = vadd.f32 %v652, %v654
        %v657 = vld [vmem:[%s192] sm:$0xff]
        %v658 = vld [vmem:[%s192 + $0x8] sm:$0xff]
        %v659 = vadd.f32 %v655, %v657
        %v660 = vadd.f32 %v656, %v658
        %s661 = smul.addr %s190, 8
        %s662 = scalar_lea.vmem %s185, %s661 [#allocation5]
        %663 = vst [vmem:[%s662] sm:$0xff] %v659
        %664 = vst [vmem:[%s662 + $0x8] sm:$0xff] %v660
        %s665 = sld [smem:[#allocation2 + $0x1c]]
        %v666 = vstv %s665
        %v667 = vmul.f32 %v569, %v666
        %v668 = vmul.f32 %v570, %v666
        %s669 = sld [smem:[#allocation2 + $0x1d]]
        %v670 = vstv %s669
        %v671 = vmul.f32 %v623, %v670
        %v672 = vmul.f32 %v624, %v670
        %v673 = vadd.f32 %v667, %v671
        %v674 = vadd.f32 %v668, %v672
        %s675 = sld [smem:[#allocation2 + $0x28]]
        %v676 = vstv %s675
        %v677 = vadd.f32 %v673, %v676
        %v678 = vadd.f32 %v674, %v676
        %v679 = vld [vmem:[%s197] sm:$0xff]
        %v680 = vld [vmem:[%s197 + $0x8] sm:$0xff]
        %v681 = vadd.f32 %v677, %v679
        %v682 = vadd.f32 %v678, %v680
        %s683 = smul.addr %s195, 8
        %s684 = scalar_lea.vmem %s185, %s683 [#allocation5]
        %685 = vst [vmem:[%s684] sm:$0xff] %v681
        %686 = vst [vmem:[%s684 + $0x8] sm:$0xff] %v682
        %s687 = sld [smem:[#allocation2 + $0x1e]]
        %v688 = vstv %s687
        %v689 = vmul.f32 %v569, %v688
        %v690 = vmul.f32 %v570, %v688
        %s691 = sld [smem:[#allocation2 + $0x1f]]
        %v692 = vstv %s691
        %v693 = vmul.f32 %v623, %v692
        %v694 = vmul.f32 %v624, %v692
        %v695 = vadd.f32 %v689, %v693
        %v696 = vadd.f32 %v690, %v694
        %s697 = sld [smem:[#allocation2 + $0x29]]
        %v698 = vstv %s697
        %v699 = vadd.f32 %v695, %v698
        %v700 = vadd.f32 %v696, %v698
        %v701 = vld [vmem:[%s202] sm:$0xff]
        %v702 = vld [vmem:[%s202 + $0x8] sm:$0xff]
        %v703 = vadd.f32 %v699, %v701
        %v704 = vadd.f32 %v700, %v702
        %s705 = smul.addr %s200, 8
        %s706 = scalar_lea.vmem %s185, %s705 [#allocation5]
        %707 = vst [vmem:[%s706] sm:$0xff] %v703
        %708 = vst [vmem:[%s706 + $0x8] sm:$0xff] %v704
        %s709 = sand.u32 %s69, 1
        %s710 = sand.u32 %s69, 1
        %s711 = smul.addr %s710, 64
        %s712 = scalar_lea.vmem [#allocation5], %s711
        // Predicated region
        $region56: #{nonlocal_block.1} parent=46 // pred_check
          %p713 = pneg %p79
        $region57: #{nonlocal_block.1} parent=46 // pred_check_branch
          %715 = sbr.rel (%p713) target = $region59
        $region58: #{nonlocal_block.1} parent=46 // pred_region
          %s716 = smul.u32 2, %s14
          %s717 = smul.addr %s716, 8
          %s718 = scalar_lea.vmem %s2, %s717
          // Predicated region
          $region60: #{nonlocal_block.1} parent=58 // pred_check
            _
          $region61: #{nonlocal_block.1} parent=58 // pred_check_branch
            %720 = sbr.rel (0) target = $region63
          $region62: #{nonlocal_block.1} parent=58 // pred_region
            // Predicated region
            $region64: #{nonlocal_block.1} parent=62 // pred_check
              _
            $region65: #{nonlocal_block.1} parent=62 // pred_check_branch
              %722 = sbr.rel (0) target = $region67
            $region66: #{nonlocal_block.1} parent=62 // pred_region
              loop: start=0, step=1, limit=1
              $region68: #{nonlocal_block.1} parent=66 // loop_pre_header
                _
              $region69: #{nonlocal_block.1} parent=66 // loop_header
                %s724 = sphi 0, %s728
                %p725 = scmp.ge.s32.totalorder %s724, 1
                %s729 = sphi %s712, %s712
                %s730 = sphi %s718, %s718
              $region70: #{nonlocal_block.1} parent=66 // loop_header_branch
                %727 = sbr.rel (%p725) target = $region74
              $region71: #{nonlocal_block.1} parent=66 // loop_body
                %v731 = vld [vmem:[%s729] sm:$0xff]
                %732 = vst [vmem:[%s730] sm:$0xff] %v731
                %v733 = vld [vmem:[%s729 + $0x8] sm:$0xff]
                %734 = vst [vmem:[%s730 + $0x8] sm:$0xff] %v733
                %v735 = vld [vmem:[%s729 + $0x10] sm:$0xff]
                %736 = vst [vmem:[%s730 + $0x20] sm:$0xff] %v735
                %v737 = vld [vmem:[%s729 + $0x18] sm:$0xff]
                %738 = vst [vmem:[%s730 + $0x28] sm:$0xff] %v737
                %v739 = vld [vmem:[%s729 + $0x20] sm:$0xff]
                %740 = vst [vmem:[%s730 + $0x40] sm:$0xff] %v739
                %v741 = vld [vmem:[%s729 + $0x28] sm:$0xff]
                %742 = vst [vmem:[%s730 + $0x48] sm:$0xff] %v741
                %v743 = vld [vmem:[%s729 + $0x30] sm:$0xff]
                %744 = vst [vmem:[%s730 + $0x60] sm:$0xff] %v743
                %v745 = vld [vmem:[%s729 + $0x38] sm:$0xff]
                %746 = vst [vmem:[%s730 + $0x68] sm:$0xff] %v745
              $region72: #{nonlocal_block.1} parent=66 // loop_footer
                %s728 = sadd.s32 1, %s724
              $region73: #{nonlocal_block.1} parent=66 // loop_footer_branch
                %723 = sbr.rel target = $region69
              $region74: #{nonlocal_block.1} parent=66 // loop_exit
                _
            $region67: #{nonlocal_block.1} parent=62 // pred_fallthru
              _
            // Predicated region
            $region75: #{nonlocal_block.1} parent=62 // pred_check
              _
            $region76: #{nonlocal_block.1} parent=62 // pred_check_branch
              %748 = sbr.rel target = $region78
            $region77: #{nonlocal_block.1} parent=62 // pred_region
              _
            $region78: #{nonlocal_block.1} parent=62 // pred_fallthru
              _
          $region63: #{nonlocal_block.1} parent=58 // pred_fallthru
            _
          %749 = vnop
        $region59: #{nonlocal_block.1} parent=46 // pred_fallthru
          _
      $region47: #{nonlocal_block.1} parent=5 // pred_fallthru
        _
      %p750 = scmp.le.s32.totalorder 2, %s9
      // Predicated region
      $region79: #{nonlocal_block.1} parent=5 // pred_check
        %p751 = pneg %p750
      $region80: #{nonlocal_block.1} parent=5 // pred_check_branch
        %753 = sbr.rel (%p751) target = $region82
      $region81: #{nonlocal_block.1} parent=5 // pred_region
        %s754 = ssub.s32 %s9, 2
        // Predicated region
        $region83: #{nonlocal_block.1} parent=81 // pred_check
          %p755 = pneg %p85
        $region84: #{nonlocal_block.1} parent=81 // pred_check_branch
          %757 = sbr.rel (%p755) target = $region86
        $region85: #{nonlocal_block.1} parent=81 // pred_region
          %s758 = sand.u32 %s70, 1
          %s759 = sand.u32 %s70, 1
          %s760 = smul.addr %s759, 64
          %s761 = scalar_lea.vmem [#allocation5], %s760
        $region86: #{nonlocal_block.1} parent=81 // pred_fallthru
          _
      $region82: #{nonlocal_block.1} parent=5 // pred_fallthru
        _
    $region6: #{nonlocal_block.1} parent=1 // loop_footer
      %s13 = sadd.s32 1, %s9
    $region7: #{nonlocal_block.1} parent=1 // loop_footer_branch
      %8 = sbr.rel target = $region3
    $region8: #{nonlocal_block.1} parent=1 // loop_exit
      _
    %762 = vsyncpa [#allocation3], 1
    %s763 = scalar_lea.sflag [#allocation3], 1
    %764 = vsyncpa %s763, 1

</llo_original>
